<compile_context>
chip_gen: v7x
topology: tpu7x:2x2x1
jax: 0.10.0
libtpu: 0.0.40
codegen_flags: <defaults>
</compile_context>

<pallas_src>
import jax
import jax.numpy as jnp
from jax.experimental import pallas as pl
from jax.experimental.pallas import tpu as pltpu

_LANE = 128
_VMEM_LIMIT = 48 * 1024 * 1024         # scoped VMEM limit, safe on v5e/v6e/v7x
_TILE_BUDGET = 32 * 1024 * 1024        # double-buffered (input + output) tiles
_STEP_INPUT_TARGET = 12 * 1024 * 1024  # per-step input bytes (>=11 MB for v7x roofline)
_MAX_LIVE_ELEMS = 8192                 # f32 accumulator sub-block stays in vregs


def _prefer_two_steps():
    # v7x has 2 TensorCores per chip and "parallel" grid axes are sharded across
    # them; a 1-step grid would idle one TC.  v5e/v6e (128 MiB VMEM) are
    # single-core, so no such constraint there.
    try:
        cap = getattr(pltpu.get_tpu_info(), "vmem_capacity_bytes", None)
    except Exception:
        cap = None
    if cap is not None and cap >= 100 * 1024 * 1024:
        return False                   # v5e / v6e (single TensorCore)
    return True                        # v7x or unknown: be conservative


def _select_tiling(n, c, hw, itemsize, prefer_two_steps):
    """Pick (tn, tile_hw): batch fold and spatial tile, sized by bytes."""

    def in_bytes(tn, thw):
        return tn * thw * c * itemsize

    def fits(tn, thw):
        # double-buffered input tile + double-buffered output tile
        return 2 * tn * thw * (c + 1) * itemsize <= _TILE_BUDGET

    if hw % _LANE == 0:
        thw_cands = [d for d in range(_LANE, hw + 1, _LANE) if hw % d == 0]
    else:
        thw_cands = [hw]               # full-dim block is always layout-legal
    tn_cands = [d for d in range(1, n + 1) if n % d == 0]

    best, best_key = None, None
    for thw in thw_cands:
        for tn in tn_cands:
            if not fits(tn, thw):
                continue
            steps = (n // tn) * (hw // thw)
            ib = in_bytes(tn, thw)
            meets = ib >= _STEP_INPUT_TARGET
            key = (
                (steps >= 2) if prefer_two_steps else True,  # keep both v7x TCs busy
                meets,                                       # amortize per-step overhead
                thw == hw,                                   # contiguous per-element DMA
                -ib if meets else ib,                        # smallest >= target, else largest
            )
            if best is None or key > best_key:
                best, best_key = (tn, thw), key
    if best is None:                                         # gigantic C: smallest legal tile
        best = (1, thw_cands[0])
    return best


def _fc_kernel(x_ref, w_ref, b_ref, o_ref):
    # x_ref: (1, TN, C, T)  input tile, native dtype (VMEM)
    # w_ref: (C,)           weights, f32 scalars (SMEM)
    # b_ref: (1,)           bias, f32 scalar (SMEM)
    # o_ref: (1, TN, T)     output tile, input dtype (sublane/lane dense)
    _, tn, c_dim, t_dim = x_ref.shape
    ws = [w_ref[c] for c in range(c_dim)]        # hoist SMEM scalar loads
    bias = b_ref[0]

    # Static sub-block sizes: keep the live f32 accumulator (+ one operand
    # slice) well inside the vreg file so the per-channel FMA loop never
    # spills, while keeping every store a dense (rows, lanes) block.
    if t_dim % _LANE == 0:
        cap = min(t_dim, max(_LANE, (_MAX_LIVE_ELEMS // tn) // _LANE * _LANE))
        cc = max(d for d in range(_LANE, cap + 1, _LANE) if t_dim % d == 0)
    else:
        cc = t_dim                               # odd full-row tile (small cases)
    rc_cands = [d for d in range(1, tn + 1) if tn % d == 0 and d * cc <= _MAX_LIVE_ELEMS]
    rc = max(rc_cands) if rc_cands else 1

    for r0 in range(0, tn, rc):
        rows = pl.ds(r0, rc)
        for t0 in range(0, t_dim, cc):
            cols = pl.ds(t0, cc)
            # f32 scalar * native-dtype slice promotes to f32 on the VPU:
            # exact f32 accumulation, no materialized f32 copy of the tile.
            acc = ws[0] * x_ref[0, rows, 0, cols]            # (rc, cc) f32
            for ch in range(1, c_dim):
                acc = acc + ws[ch] * x_ref[0, rows, ch, cols]
            o_ref[0, rows, cols] = (acc + bias).astype(o_ref.dtype)


def fully_conn_layer(x, weight, bias):
    """x: (N, C, H, W); weight: (1, C, 1, 1); bias: (1,). Returns (N, 1, H, W)."""
    N, C, H, W = x.shape
    HW = H * W
    itemsize = jnp.dtype(x.dtype).itemsize
    prefer_two = _prefer_two_steps()

    w1 = weight.reshape(C).astype(jnp.float32)   # tiny: SMEM scalars
    b1 = bias.reshape(1).astype(jnp.float32)

    # Full (C, HW) rows per batch element are preferred (contiguous DMA).  If
    # the spatial axis is not 128-aligned AND such a row would overflow the
    # double-buffered budget, pad it up to a lane multiple so it can be split
    # into lane-aligned tiles (rare; costs one extra HBM pass).
    x3 = x.reshape(N, C, HW)
    HW_eff = HW
    if HW % _LANE != 0 and 2 * HW * (C + 1) * itemsize > _TILE_BUDGET:
        pad = (-HW) % _LANE
        x3 = jnp.pad(x3, ((0, 0), (0, 0), (0, pad)))
        HW_eff = HW + pad

    tn, tile_hw = _select_tiling(N, C, HW_eff, itemsize, prefer_two)
    grid = (N // tn, HW_eff // tile_hw)

    # Fold TN batch elements into their own array axis (free reshape) so the
    # output block (1, TN, TILE_HW) packs TN onto sublanes.
    x4 = x3.reshape(N // tn, tn, C, HW_eff)

    out = pl.pallas_call(
        _fc_kernel,
        out_shape=jax.ShapeDtypeStruct((N // tn, tn, HW_eff), x.dtype),
        grid_spec=pltpu.PrefetchScalarGridSpec(
            num_scalar_prefetch=0,
            grid=grid,
            in_specs=[
                # (1, TN, C, TILE_HW): last two dims (C, TILE_HW) are legal
                # (C == full dim; TILE_HW multiple of 128 or == HW_eff).
                pl.BlockSpec((1, tn, C, tile_hw), lambda n, t: (n, 0, 0, t)),
                # weights + bias live in SMEM as scalars (VPU FMA path).
                pl.BlockSpec(memory_space=pltpu.MemorySpace.SMEM),
                pl.BlockSpec(memory_space=pltpu.MemorySpace.SMEM),
            ],
            out_specs=pl.BlockSpec((1, tn, tile_hw), lambda n, t: (n, 0, t)),
        ),
        compiler_params=pltpu.CompilerParams(
            dimension_semantics=("parallel", "parallel"),
            vmem_limit_bytes=_VMEM_LIMIT,
        ),
    )(x4, w1, b1)

    out = out.reshape(N, 1, HW_eff)
    if HW_eff != HW:
        out = out[:, :, :HW]
    return out.reshape(N, 1, H, W)


def _reference(x, weight, bias):
    # Plain-JAX reference for the 1x1 conv (C -> 1), f32 math.
    w = weight.reshape(-1).astype(jnp.float32)
    y = jnp.einsum("nchw,c->nhw", x.astype(jnp.float32), w) + bias.astype(jnp.float32)[0]
    return y[:, None, :, :].astype(x.dtype)


if __name__ == "__main__":
    key = jax.random.PRNGKey(0)
    kx, kw, kb = jax.random.split(key, 3)

    N, C, H, W = 2, 4, 16, 16
    x = jax.random.normal(kx, (N, C, H, W), dtype=jnp.float32)

    # Deterministic parameter init (mimics nn.Conv2d default uniform range)
    fan_in = C * 1 * 1
    bound = 1.0 / (fan_in ** 0.5)
    weight = jax.random.uniform(kw, (1, C, 1, 1), minval=-bound, maxval=bound,
                                dtype=jnp.float32)
    bias = jax.random.uniform(kb, (1,), minval=-bound, maxval=bound,
                              dtype=jnp.float32)

    y = fully_conn_layer(x, weight, bias)
    y = jax.block_until_ready(y)

    y_ref = _reference(x, weight, bias)
    assert y.shape == (N, 1, H, W)
    assert y.dtype == x.dtype
    assert jnp.allclose(y, y_ref, atol=5e-3, rtol=5e-3)

    print("KERNEL_OK")
</pallas_src>

<mosaic_0001>
module attributes {stable_mosaic.version = 11 : i64} {
  func.func @_fc_kernel(%arg0: i32, %arg1: i32, %arg2: memref<1x1x4x256xf32, #tpu.memory_space<vmem>>, %arg3: memref<4xf32, #tpu.memory_space<smem>>, %arg4: memref<1xf32, #tpu.memory_space<smem>>, %arg5: memref<1x1x256xf32, #tpu.memory_space<vmem>>) attributes {dimension_semantics = [#tpu.dimension_semantics<parallel>, #tpu.dimension_semantics<parallel>], iteration_bounds = array<i64: 2, 1>, scalar_prefetch = 0 : i64, scratch_operands = 0 : i64, tpu.core_type = #tpu.core_type<tc>, window_params = [{transform_indices = @transform_0, window_bounds = array<i64: 1, 1, 4, 256>}, {transform_indices = @transform_1, window_bounds = array<i64: 4>}, {transform_indices = @transform_2, window_bounds = array<i64: 1>}, {transform_indices = @transform_3, window_bounds = array<i64: 1, 1, 256>}]} {
    %c0 = arith.constant 0 : index
    %0 = memref.load %arg3[%c0] : memref<4xf32, #tpu.memory_space<smem>>
    %c1 = arith.constant 1 : index
    %1 = memref.load %arg3[%c1] : memref<4xf32, #tpu.memory_space<smem>>
    %c2 = arith.constant 2 : index
    %2 = memref.load %arg3[%c2] : memref<4xf32, #tpu.memory_space<smem>>
    %c3 = arith.constant 3 : index
    %3 = memref.load %arg3[%c3] : memref<4xf32, #tpu.memory_space<smem>>
    %c0_0 = arith.constant 0 : index
    %4 = memref.load %arg4[%c0_0] : memref<1xf32, #tpu.memory_space<smem>>
    %c0_1 = arith.constant 0 : index
    %c0_2 = arith.constant 0 : index
    %c0_3 = arith.constant 0 : index
    %c0_4 = arith.constant 0 : index
    %5 = vector.load %arg2[%c0_1, %c0_2, %c0_3, %c0_4] : memref<1x1x4x256xf32, #tpu.memory_space<vmem>>, vector<1x1x1x256xf32>
    %6 = vector.shape_cast %5 : vector<1x1x1x256xf32> to vector<1x256xf32>
    %7 = vector.broadcast %0 : f32 to vector<1x256xf32>
    %8 = arith.mulf %7, %6 : vector<1x256xf32>
    %c0_5 = arith.constant 0 : index
    %c0_6 = arith.constant 0 : index
    %c1_7 = arith.constant 1 : index
    %c0_8 = arith.constant 0 : index
    %9 = vector.load %arg2[%c0_5, %c0_6, %c1_7, %c0_8] : memref<1x1x4x256xf32, #tpu.memory_space<vmem>>, vector<1x1x1x256xf32>
    %10 = vector.shape_cast %9 : vector<1x1x1x256xf32> to vector<1x256xf32>
    %11 = vector.broadcast %1 : f32 to vector<1x256xf32>
    %12 = arith.mulf %11, %10 : vector<1x256xf32>
    %13 = arith.addf %8, %12 : vector<1x256xf32>
    %c0_9 = arith.constant 0 : index
    %c0_10 = arith.constant 0 : index
    %c2_11 = arith.constant 2 : index
    %c0_12 = arith.constant 0 : index
    %14 = vector.load %arg2[%c0_9, %c0_10, %c2_11, %c0_12] : memref<1x1x4x256xf32, #tpu.memory_space<vmem>>, vector<1x1x1x256xf32>
    %15 = vector.shape_cast %14 : vector<1x1x1x256xf32> to vector<1x256xf32>
    %16 = vector.broadcast %2 : f32 to vector<1x256xf32>
    %17 = arith.mulf %16, %15 : vector<1x256xf32>
    %18 = arith.addf %13, %17 : vector<1x256xf32>
    %c0_13 = arith.constant 0 : index
    %c0_14 = arith.constant 0 : index
    %c3_15 = arith.constant 3 : index
    %c0_16 = arith.constant 0 : index
    %19 = vector.load %arg2[%c0_13, %c0_14, %c3_15, %c0_16] : memref<1x1x4x256xf32, #tpu.memory_space<vmem>>, vector<1x1x1x256xf32>
    %20 = vector.shape_cast %19 : vector<1x1x1x256xf32> to vector<1x256xf32>
    %21 = vector.broadcast %3 : f32 to vector<1x256xf32>
    %22 = arith.mulf %21, %20 : vector<1x256xf32>
    %23 = arith.addf %18, %22 : vector<1x256xf32>
    %24 = vector.broadcast %4 : f32 to vector<1x256xf32>
    %25 = arith.addf %23, %24 : vector<1x256xf32>
    %c0_17 = arith.constant 0 : index
    %c0_18 = arith.constant 0 : index
    %c0_19 = arith.constant 0 : index
    %26 = vector.load %arg5[%c0_17, %c0_18, %c0_19] : memref<1x1x256xf32, #tpu.memory_space<vmem>>, vector<1x1x256xf32>
    %27 = vector.shape_cast %26 : vector<1x1x256xf32> to vector<1x256xf32>
    %28 = vector.shape_cast %25 : vector<1x256xf32> to vector<1x1x256xf32>
    tpu.vector_store %arg5[%c0_17, %c0_18, %c0_19], %28 {strides = array<i32>} : memref<1x1x256xf32, #tpu.memory_space<vmem>>, vector<1x1x256xf32>,
    return
  }
  func.func @transform_0(%arg0: i32, %arg1: i32) -> (i32, i32, i32, i32) {
    %c0_i32 = arith.constant 0 : i32
    %c0_i32_0 = arith.constant 0 : i32
    %c0_i32_1 = arith.constant 0 : i32
    return %arg0, %c0_i32, %c0_i32_0, %arg1 : i32, i32, i32, i32
  }
  func.func @transform_1(%arg0: i32, %arg1: i32) -> i32 {
    %c0_i32 = arith.constant 0 : i32
    %c0_i32_0 = arith.constant 0 : i32
    return %c0_i32 : i32
  }
  func.func @transform_2(%arg0: i32, %arg1: i32) -> i32 {
    %c0_i32 = arith.constant 0 : i32
    %c0_i32_0 = arith.constant 0 : i32
    return %c0_i32 : i32
  }
  func.func @transform_3(%arg0: i32, %arg1: i32) -> (i32, i32, i32) {
    %c0_i32 = arith.constant 0 : i32
    %c0_i32_0 = arith.constant 0 : i32
    return %arg0, %c0_i32, %arg1 : i32, i32, i32
  }
}

</mosaic_0001>

<llo_original>
// kernel: tpu_custom_call.1
$region0: #{tpu_custom_call.1}
  #allocation0 [shape = 'u32[]', space=smem, size = 0x4, offset = 0x4, fixed_abs, tag = 'smem constant byte address 0x4 - core index']
  #allocation1 [shape = 'u32[144,128]{1,0:T(1,128)}', space=vmem, size = 0x12000, scoped, tag = 'internal scratch']
  #allocation2 [shape = 'f32[1]{0:T(128)S(6)}', space=smem, size = 0x200, scoped, tag = 'scoped memory for tpu_custom_call.1']
  %s0 = inlined_call_operand.hbm [shape: f32[2,1,4,256], index: 0, kind: input, shape index: {}]
  %s1 = inlined_call_operand.vmem [shape: f32[4], index: 1, kind: input, shape index: {}]
  %s2 = inlined_call_operand.<no memory space> [shape: f32[1], index: 2, kind: input, shape index: {}]
  %s3 = inlined_call_operand.hbm [shape: f32[2,1,256], index: 3, kind: output, shape index: {}]
  %s4 = sld [smem:[#allocation0]]
  $region53: #{tpu_custom_call.1} parent=0
    _
  %s6 = ssub.s32 1, %s4
  %s7 = scalar_select 0, %s6, %s4
  %8 = sst [smem:[#allocation2]] %s2
  $region1: #{tpu_custom_call.1} parent=0
    #allocation3 [shape = 'u8[8192]{0}', space=vmem, size = 0x2000, scoped, tag = 'input window, operand 0']
    #allocation4 [shape = 's32[2]{0}', space=sflag, size = 0x8, scoped, tag = 'scoped memory for tpu_custom_call.1']
    #allocation5 [shape = 's32[2]{0}', space=sflag, size = 0x8, scoped, tag = 'scoped memory for tpu_custom_call.1']
    #allocation6 [shape = 's32[2]{0}', space=sflag, size = 0x8, scoped, tag = 'scoped memory for tpu_custom_call.1']
    #allocation7 [shape = 'u8[512]{0}', space=smem, size = 0x200, scoped, tag = 'input window, operand 1, single buffered']
    #allocation8 [shape = 'u8[2048]{0}', space=vmem, size = 0x800, scoped, tag = 'output window, operand 0']
    %9 = vsyncpa [#allocation4], 0
    %s10 = scalar_lea.sflag [#allocation4], 1
    %11 = vsyncpa %s10, 0
    %12 = vsyncpa [#allocation6], 0
    %13 = vsyncpa [#allocation5], 0
    %s14 = scalar_lea.sflag [#allocation5], 1
    %15 = vsyncpa %s14, 0
    loop: start=0, step=1, limit=4
    $region2: #{tpu_custom_call.1} parent=1 // loop_pre_header
      _
    $region3: #{tpu_custom_call.1} parent=1 // loop_header
      %s17 = sphi 0, %s21
      %p18 = scmp.ge.s32.totalorder %s17, 4
      %s24 = sphi 0, %s36
      %s25 = sphi 0, %s32
      %s26 = sphi 0, %s24
      %s27 = sphi 0, %s25
      %s28 = sphi 0, %s26
      %s29 = sphi 0, %s27
      %s41 = sphi 0, %s43
      %s44 = sphi 0, %s41
      %s45 = sphi 0, %s44
      %s61 = sphi 0, %s45
      %s65 = sphi 0, %s65
      %s67 = sphi 0, %s65
      %s68 = sphi 0, %s67
      %s82 = sphi 0, %s68
      %s86 = sphi 0, %s86
      %s88 = sphi 0, %s86
      %s89 = sphi 0, %s88
      %s103 = sphi 0, %s89
      %s111 = sphi 0, %s113
      %s114 = sphi 0, %s111
      %s115 = sphi 0, %s114
      %s131 = sphi 0, %s115
    $region4: #{tpu_custom_call.1} parent=1 // loop_header_branch
      %20 = sbr.rel (%p18) target = $region8
    $region5: #{tpu_custom_call.1} parent=1 // loop_body
      %s22 = ssub.s32 %s17, 1
      %s23 = ssub.s32 %s17, 2
      %s30 = sadd.s32 1, %s25
      %p31 = scmp.ge.s32.totalorder %s30, 1
      %s32 = scalar_select %p31, 0, %s30
      %s33 = sadd.s32 1, %s24
      %s34 = scalar_select %p31, %s33, %s24
      %p35 = scmp.ge.s32.totalorder %s34, 2
      %s36 = scalar_select %p35, 0, %s34
      %s37 = ssub.s32 %s24, %s36
      %s38 = ssub.s32 %s25, %s32
      %s39 = sor.u32 %s37, %s38
      %p40 = scmp.eq.s32.totalorder %s39, 0
      %s42 = sadd.s32 %s41, 1
      %s43 = scalar_select %p40, %s41, %s42
      %p46 = pneg %p40
      %p47 = scmp.eq.s32.totalorder %s17, 1
      %p48 = por %p46, %p47
      %p49 = scmp.ne.s32.totalorder %s41, %s44
      %p50 = scmp.eq.s32.totalorder %s17, 0
      %p51 = por %p49, %p50
      %p52 = scmp.ne.s32.totalorder %s41, %s44
      %p53 = scmp.eq.s32.totalorder %s22, 1
      %p54 = por %p52, %p53
      %p55 = scmp.ne.s32.totalorder %s44, %s45
      %p56 = scmp.eq.s32.totalorder %s22, 0
      %p57 = por %p55, %p56
      %p58 = scmp.ne.s32.totalorder %s44, %s45
      %p59 = scmp.eq.s32.totalorder %s23, 1
      %p60 = por %p58, %p59
      %p62 = scmp.ne.s32.totalorder %s45, %s61
      %p63 = scmp.eq.s32.totalorder %s23, 0
      %p64 = por %p62, %p63
      %s66 = sadd.s32 %s65, 1
      %p69 = scmp.eq.s32.totalorder %s17, 1
      %p70 = scmp.ne.s32.totalorder %s65, %s67
      %p71 = scmp.eq.s32.totalorder %s17, 0
      %p72 = por %p70, %p71
      %p73 = scmp.ne.s32.totalorder %s65, %s67
      %p74 = scmp.eq.s32.totalorder %s22, 1
      %p75 = por %p73, %p74
      %p76 = scmp.ne.s32.totalorder %s67, %s68
      %p77 = scmp.eq.s32.totalorder %s22, 0
      %p78 = por %p76, %p77
      %p79 = scmp.ne.s32.totalorder %s67, %s68
      %p80 = scmp.eq.s32.totalorder %s23, 1
      %p81 = por %p79, %p80
      %p83 = scmp.ne.s32.totalorder %s68, %s82
      %p84 = scmp.eq.s32.totalorder %s23, 0
      %p85 = por %p83, %p84
      %s87 = sadd.s32 %s86, 1
      %p90 = scmp.eq.s32.totalorder %s17, 1
      %p91 = scmp.ne.s32.totalorder %s86, %s88
      %p92 = scmp.eq.s32.totalorder %s17, 0
      %p93 = por %p91, %p92
      %p94 = scmp.ne.s32.totalorder %s86, %s88
      %p95 = scmp.eq.s32.totalorder %s22, 1
      %p96 = por %p94, %p95
      %p97 = scmp.ne.s32.totalorder %s88, %s89
      %p98 = scmp.eq.s32.totalorder %s22, 0
      %p99 = por %p97, %p98
      %p100 = scmp.ne.s32.totalorder %s88, %s89
      %p101 = scmp.eq.s32.totalorder %s23, 1
      %p102 = por %p100, %p101
      %p104 = scmp.ne.s32.totalorder %s89, %s103
      %p105 = scmp.eq.s32.totalorder %s23, 0
      %p106 = por %p104, %p105
      %s107 = ssub.s32 %s24, %s36
      %s108 = ssub.s32 %s25, %s32
      %s109 = sor.u32 %s107, %s108
      %p110 = scmp.eq.s32.totalorder %s109, 0
      %s112 = sadd.s32 %s111, 1
      %s113 = scalar_select %p110, %s111, %s112
      %p116 = pneg %p110
      %p117 = scmp.eq.s32.totalorder %s17, 1
      %p118 = por %p116, %p117
      %p119 = scmp.ne.s32.totalorder %s111, %s114
      %p120 = scmp.eq.s32.totalorder %s17, 0
      %p121 = por %p119, %p120
      %p122 = scmp.ne.s32.totalorder %s111, %s114
      %p123 = scmp.eq.s32.totalorder %s22, 1
      %p124 = por %p122, %p123
      %p125 = scmp.ne.s32.totalorder %s114, %s115
      %p126 = scmp.eq.s32.totalorder %s22, 0
      %p127 = por %p125, %p126
      %p128 = scmp.ne.s32.totalorder %s114, %s115
      %p129 = scmp.eq.s32.totalorder %s23, 1
      %p130 = por %p128, %p129
      %p132 = scmp.ne.s32.totalorder %s115, %s131
      %p133 = scmp.eq.s32.totalorder %s23, 0
      %p134 = por %p132, %p133
      %p135 = scmp.le.s32.totalorder 1, %s17
      %p136 = scmp.lt.s32.totalorder %s17, 3
      %p137 = pnand %p135, %p136
      %p138 = pneg %p137
      // Predicated region
      $region9: #{tpu_custom_call.1} parent=5 // pred_check
        _
      $region10: #{tpu_custom_call.1} parent=5 // pred_check_branch
        %140 = sbr.rel (%p137) target = $region12
      $region11: #{tpu_custom_call.1} parent=5 // pred_region
        %s141 = ssub.s32 %s17, 1
        // Predicated region
        $region13: #{tpu_custom_call.1} parent=11 // pred_check
          %p142 = pneg %p78
        $region14: #{tpu_custom_call.1} parent=11 // pred_check_branch
          %144 = sbr.rel (%p142) target = $region16
        $region15: #{tpu_custom_call.1} parent=11 // pred_region
          %s146 = ssub.s32 16, 16
          %147 = vsyncadd [#allocation6], %s146
          %s149 = sshll.u32 %s1, 4
          %s150 = int_to_ptr.vmem [resolvable:$true] %s149
          %152 = dma.vmem_to_smem %s150, 16, [#allocation7], [#allocation6]
        $region16: #{tpu_custom_call.1} parent=11 // pred_fallthru
          _
        // Predicated region
        $region17: #{tpu_custom_call.1} parent=11 // pred_check
          %p153 = pneg %p99
        $region18: #{tpu_custom_call.1} parent=11 // pred_check_branch
          %155 = sbr.rel (%p153) target = $region20
        $region19: #{tpu_custom_call.1} parent=11 // pred_region
          _
        $region20: #{tpu_custom_call.1} parent=11 // pred_fallthru
          _
      $region12: #{tpu_custom_call.1} parent=5 // pred_fallthru
        _
      %p156 = scmp.lt.s32.totalorder %s17, 2
      // Predicated region
      $region21: #{tpu_custom_call.1} parent=5 // pred_check
        %p157 = pneg %p156
      $region22: #{tpu_custom_call.1} parent=5 // pred_check_branch
        %159 = sbr.rel (%p157) target = $region24
      $region23: #{tpu_custom_call.1} parent=5 // pred_region
        // Predicated region
        $region25: #{tpu_custom_call.1} parent=23 // pred_check
          %p160 = pneg %p51
        $region26: #{tpu_custom_call.1} parent=23 // pred_check_branch
          %162 = sbr.rel (%p160) target = $region28
        $region27: #{tpu_custom_call.1} parent=23 // pred_region
          %s163 = sand.u32 %s41, 1
          %s164 = scalar_lea.sflag [#allocation4], %s163
          %s165 = sand.u32 %s41, 1
          %s166 = smul.addr %s165, 8
          %s167 = scalar_lea.vmem [#allocation3], %s166
          %s168 = smul.u32 2, %s25
          %s170 = ssub.s32 128, 128
          %171 = vsyncadd %s164, %s170
          %s172 = smul.addr %s24, 2
          %s173 = sadd.s32 %s168, %s172
          %s174 = smul.addr %s173, 64
          %s175 = scalar_lea.hbm %s0, %s174
          %s177 = sshll.u32 %s167, 4
          %s178 = int_to_ptr.vmem [resolvable:$true] %s177
          %180 = dma.hbm_to_vmem [thread:$0]  %s175, 128, %s178, %s164
        $region28: #{tpu_custom_call.1} parent=23 // pred_fallthru
          _
      $region24: #{tpu_custom_call.1} parent=5 // pred_fallthru
        _
      %p181 = scmp.le.s32.totalorder 1, %s17
      %p182 = scmp.lt.s32.totalorder %s17, 3
      %p183 = pnand %p181, %p182
      %p184 = pneg %p183
      // Predicated region
      $region29: #{tpu_custom_call.1} parent=5 // pred_check
        _
      $region30: #{tpu_custom_call.1} parent=5 // pred_check_branch
        %186 = sbr.rel (%p183) target = $region32
      $region31: #{tpu_custom_call.1} parent=5 // pred_region
        %s187 = ssub.s32 %s17, 1
        %s188 = sand.u32 %s44, 1
        %s189 = scalar_lea.sflag [#allocation4], %s188
        %s190 = sand.u32 %s44, 1
        %s191 = smul.addr %s190, 8
        %s192 = scalar_lea.vmem [#allocation3], %s191
        // Predicated region
        $region33: #{tpu_custom_call.1} parent=31 // pred_check
          %p193 = pneg %p57
        $region34: #{tpu_custom_call.1} parent=31 // pred_check_branch
          %195 = sbr.rel (%p193) target = $region36
        $region35: #{tpu_custom_call.1} parent=31 // pred_region
          %196 = dma.done %s189, 128
        $region36: #{tpu_custom_call.1} parent=31 // pred_fallthru
          _
        // Predicated region
        $region37: #{tpu_custom_call.1} parent=31 // pred_check
          %p197 = pneg %p78
        $region38: #{tpu_custom_call.1} parent=31 // pred_check_branch
          %199 = sbr.rel (%p197) target = $region40
        $region39: #{tpu_custom_call.1} parent=31 // pred_region
          %200 = dma.done [#allocation6], 16
        $region40: #{tpu_custom_call.1} parent=31 // pred_fallthru
          _
        %201 = sfence
        %s202 = sand.u32 %s44, 1
        %s203 = scalar_lea.sflag [#allocation4], %s202
        %s204 = sand.u32 %s44, 1
        %s205 = smul.addr %s204, 8
        %s206 = scalar_lea.vmem [#allocation3], %s205
        %p207 = pneg %p57
        %p208 = pneg %p54
        %p209 = pneg %p78
        %p210 = pneg %p75
        %p211 = pneg %p99
        %p212 = pneg %p96
        %p213 = pneg %p127
        %p214 = pneg %p124
        %s215 = sand.u32 %s114, 1
        %s216 = scalar_lea.sflag [#allocation5], %s215
        %s217 = sand.u32 %s114, 1
        %s218 = smul.addr %s217, 2
        %s219 = scalar_lea.vmem [#allocation8], %s218
        %s220 = smul.u32 2, %s27
        %s221 = smul.u32 2, %s27
        %s222 = sld [smem:[#allocation7]]
        %s223 = sld [smem:[#allocation7 + $0x1]]
        %s224 = sld [smem:[#allocation7 + $0x2]]
        %s225 = sld [smem:[#allocation7 + $0x3]]
        %s226 = sld [smem:[#allocation2]]
        %v227 = vld [vmem:[%s192] ss:$4 sm:$0x3]
        %v228 = vstv %s222
        %v229 = vmul.f32 %v228, %v227
        %s230 = scalar_lea.vmem %s192, 1 [#allocation3]
        %v231 = vld [vmem:[%s230] ss:$4 sm:$0x3]
        %v232 = vstv %s223
        %v233 = vmul.f32 %v232, %v231
        %v234 = vadd.f32 %v229, %v233
        %s235 = scalar_lea.vmem %s192, 2 [#allocation3]
        %v236 = vld [vmem:[%s235] ss:$4 sm:$0x3]
        %v237 = vstv %s224
        %v238 = vmul.f32 %v237, %v236
        %v239 = vadd.f32 %v234, %v238
        %s240 = scalar_lea.vmem %s192, 3 [#allocation3]
        %v241 = vld [vmem:[%s240] ss:$4 sm:$0x3]
        %v242 = vstv %s225
        %v243 = vmul.f32 %v242, %v241
        %v244 = vadd.f32 %v239, %v243
        %v245 = vstv %s226
        %v246 = vadd.f32 %v244, %v245
        %v247 = vlaneseq
        %vm248 = vcmp.ge.s32.totalorder %v247, 0
        %vm249 = vcmp.lt.s32.totalorder %v247, 256
        %vm250 = vmand %vm248, %vm249
        %251 = vst.msk [vmem:[%s219] sm:$0x3] %vm250, %v246
        %s252 = sand.u32 %s114, 1
        %s253 = scalar_lea.sflag [#allocation5], %s252
        %s254 = sand.u32 %s114, 1
        %s255 = smul.addr %s254, 2
        %s256 = scalar_lea.vmem [#allocation8], %s255
        // Predicated region
        $region41: #{tpu_custom_call.1} parent=31 // pred_check
          %p257 = pneg %p124
        $region42: #{tpu_custom_call.1} parent=31 // pred_check_branch
          %259 = sbr.rel (%p257) target = $region44
        $region43: #{tpu_custom_call.1} parent=31 // pred_region
          %s260 = smul.u32 2, %s27
          %s262 = ssub.s32 32, 32
          %263 = vsyncadd %s253, %s262
          %s264 = smul.addr %s26, 2
          %s265 = sadd.s32 %s260, %s264
          %s266 = smul.addr %s265, 16
          %s267 = scalar_lea.hbm %s3, %s266
          %s269 = sshll.u32 %s256, 4
          %s270 = int_to_ptr.vmem [resolvable:$true] %s269
          %272 = dma.vmem_to_hbm [thread:$0]  %s270, 32, %s267, %s253
        $region44: #{tpu_custom_call.1} parent=31 // pred_fallthru
          _
      $region32: #{tpu_custom_call.1} parent=5 // pred_fallthru
        _
      %p273 = scmp.le.s32.totalorder 2, %s17
      // Predicated region
      $region45: #{tpu_custom_call.1} parent=5 // pred_check
        %p274 = pneg %p273
      $region46: #{tpu_custom_call.1} parent=5 // pred_check_branch
        %276 = sbr.rel (%p274) target = $region48
      $region47: #{tpu_custom_call.1} parent=5 // pred_region
        %s277 = ssub.s32 %s17, 2
        // Predicated region
        $region49: #{tpu_custom_call.1} parent=47 // pred_check
          %p278 = pneg %p130
        $region50: #{tpu_custom_call.1} parent=47 // pred_check_branch
          %280 = sbr.rel (%p278) target = $region52
        $region51: #{tpu_custom_call.1} parent=47 // pred_region
          %s281 = sand.u32 %s115, 1
          %s282 = scalar_lea.sflag [#allocation5], %s281
          %s283 = sand.u32 %s115, 1
          %s284 = smul.addr %s283, 2
          %s285 = scalar_lea.vmem [#allocation8], %s284
          %286 = dma.done %s282, 32
        $region52: #{tpu_custom_call.1} parent=47 // pred_fallthru
          _
      $region48: #{tpu_custom_call.1} parent=5 // pred_fallthru
        _
    $region6: #{tpu_custom_call.1} parent=1 // loop_footer
      %s21 = sadd.s32 1, %s17
    $region7: #{tpu_custom_call.1} parent=1 // loop_footer_branch
      %16 = sbr.rel target = $region3
    $region8: #{tpu_custom_call.1} parent=1 // loop_exit
      _
    %287 = vsyncpa [#allocation4], 1
    %s288 = scalar_lea.sflag [#allocation4], 1
    %289 = vsyncpa %s288, 1
    %290 = vsyncpa [#allocation5], 1
    %s291 = scalar_lea.sflag [#allocation5], 1
    %292 = vsyncpa %s291, 1
    %293 = vsyncpa [#allocation6], 1
    %s294 = scalar_lea.sflag [#allocation6], 1
    %295 = vsyncpa %s294, 1

</llo_original>
